<compile_context>
chip_gen: v7x
topology: tpu7x:2x2x1
jax: 0.10.0
libtpu: 0.0.40
codegen_flags: <defaults>
</compile_context>

<pallas_src>
import jax
import jax.numpy as jnp
from jax import lax
from jax.experimental import pallas as pl
from jax.experimental.pallas import tpu as pltpu


def _round_up(v, m):
    return (v + m - 1) // m * m


def stats_kernel(x_ref, gid_ref, inv_cnt_ref, gnw_ref, gnb_ref, ss_ref):
    """Accumulate per-graph [sum(x) | sum(x^2)]; finalize to [scale_g | shift_g]."""
    t = pl.program_id(0)

    @pl.when(t == 0)
    def _init():
        ss_ref[...] = jnp.zeros_like(ss_ref)

    x = x_ref[...].astype(jnp.float32)                    # [T, Dp]
    gid = gid_ref[...]                                    # [T, 1] int32
    num_graphs = ss_ref.shape[0]
    iota = lax.broadcasted_iota(jnp.int32, (x.shape[0], num_graphs), 1)
    onehot = (gid == iota).astype(jnp.float32)            # [T, B]; padded rows -> zeros
    xx = jnp.concatenate([x, x * x], axis=1)              # [T, 2*Dp]
    # one-hot segment-sum of [x | x^2] -> [B, 2*Dp] (contract over the node axis)
    ss_ref[...] += lax.dot_general(
        onehot, xx, (((0,), (0,)), ((), ())),
        preferred_element_type=jnp.float32)

    @pl.when(t == pl.num_programs(0) - 1)
    def _finalize():
        dp = x_ref.shape[1]
        inv_cnt = inv_cnt_ref[...]                        # [B, 1]
        seg_sum = ss_ref[:, :dp]
        seg_sq = ss_ref[:, dp:]
        mean_g = seg_sum * inv_cnt                        # [B, Dp]
        var_g = seg_sq * inv_cnt - mean_g * mean_g        # E[x^2] - mean^2
        # reference: std = sqrt(var + 1e-6); fold gnw into a per-graph scale
        scale_g = gnw_ref[...] * lax.rsqrt(var_g + 1e-6)  # [B, Dp]
        shift_g = gnb_ref[...] - mean_g * scale_g         # [B, Dp]
        ss_ref[...] = jnp.concatenate([scale_g, shift_g], axis=1)


def norm_proj_kernel(x_ref, gid_ref, ss_ref, w_ref, b_ref, out_ref):
    """Per node tile: GraphNorm (affine-folded) + exact GELU + bf16 projection."""
    x = x_ref[...].astype(jnp.float32)                    # [T, Dp]
    gid = gid_ref[...]                                    # [T, 1] int32
    num_graphs = ss_ref.shape[0]
    dp = x_ref.shape[1]
    iota = lax.broadcasted_iota(jnp.int32, (x.shape[0], num_graphs), 1)
    onehot = (gid == iota).astype(jnp.float32)            # [T, B]
    # single merged gather of [scale | shift] per node (tiny-K matmul)
    ss = jnp.dot(onehot, ss_ref[...], preferred_element_type=jnp.float32)  # [T, 2*Dp]
    scale = ss[:, :dp]
    shift = ss[:, dp:]
    y = x * scale + shift                                 # == gnw*(x-mean)/std + gnb
    act = jax.nn.gelu(y, approximate=False)               # nn.GELU() exact
    # dropout: identity (inference mode)
    # projection on the MXU native bf16 path, fp32 accumulation
    out = jnp.dot(act.astype(jnp.bfloat16), w_ref[...],
                  preferred_element_type=jnp.float32) + b_ref[...]
    out_ref[...] = out.astype(out_ref.dtype)


def graph_norm_and_proj(x, batch_num_nodes, gnw, gnb, w, b, *, tile_n=256):
    """Eval-mode forward of GraphNormAndProj (norm_type='gn', act='gelu').

    x: [N, d_in] float32 (nodes of all graphs concatenated, graphs contiguous);
    batch_num_nodes: python list of ints summing to N; w: [d_in, d_out]; b: [d_out].
    Returns [N, d_out] float32.
    """
    N, D = x.shape
    DO = w.shape[1]
    B = len(batch_num_nodes)

    # lane-dense feature dims; MXU/vreg-aligned node tiles
    Dp = _round_up(D, 128)
    DOp = _round_up(DO, 128)
    tile_n = max(8, _round_up(min(tile_n, N), 8))
    Np = _round_up(N, tile_n)
    n_tiles = Np // tile_n

    counts = jnp.asarray(batch_num_nodes, dtype=jnp.float32)                  # [B]
    graph_id = jnp.repeat(jnp.arange(B, dtype=jnp.int32),
                          jnp.asarray(batch_num_nodes), total_repeat_length=N)

    # zero-pad features / nodes; padded nodes get graph_id == B (matches no graph)
    xp = jnp.zeros((Np, Dp), jnp.float32).at[:N, :D].set(x.astype(jnp.float32))
    gidp = jnp.full((Np, 1), B, dtype=jnp.int32).at[:N, 0].set(graph_id)
    gnwp = jnp.zeros((1, Dp), jnp.float32).at[0, :D].set(gnw)
    gnbp = jnp.zeros((1, Dp), jnp.float32).at[0, :D].set(gnb)
    wp = jnp.zeros((Dp, DOp), jnp.bfloat16).at[:D, :DO].set(w.astype(jnp.bfloat16))
    bp = jnp.zeros((1, DOp), jnp.float32).at[0, :DO].set(b)
    inv_cnt = (1.0 / counts).reshape(B, 1)

    vmem_limit = 32 * 1024 * 1024   # explicit; >= v5e default, safe on v6e/v7x

    # pass 1: per-graph [scale_g | shift_g]  -> [B, 2*Dp]
    scale_shift = pl.pallas_call(
        stats_kernel,
        out_shape=jax.ShapeDtypeStruct((B, 2 * Dp), jnp.float32),
        grid=(n_tiles,),
        in_specs=[
            pl.BlockSpec((tile_n, Dp), lambda i: (i, 0)),   # x tile
            pl.BlockSpec((tile_n, 1), lambda i: (i, 0)),    # graph ids
            pl.BlockSpec((B, 1), lambda i: (0, 0)),         # 1 / nodes_per_graph
            pl.BlockSpec((1, Dp), lambda i: (0, 0)),        # gnw
            pl.BlockSpec((1, Dp), lambda i: (0, 0)),        # gnb
        ],
        out_specs=pl.BlockSpec((B, 2 * Dp), lambda i: (0, 0)),  # resident accumulator
        compiler_params=pltpu.CompilerParams(
            dimension_semantics=("arbitrary",),
            vmem_limit_bytes=vmem_limit),
    )(xp, gidp, inv_cnt, gnwp, gnbp)

    # pass 2: normalize + GELU + project, independent node tiles
    outp = pl.pallas_call(
        norm_proj_kernel,
        out_shape=jax.ShapeDtypeStruct((Np, DOp), jnp.float32),
        grid=(n_tiles,),
        in_specs=[
            pl.BlockSpec((tile_n, Dp), lambda i: (i, 0)),   # x tile
            pl.BlockSpec((tile_n, 1), lambda i: (i, 0)),    # graph ids
            pl.BlockSpec((B, 2 * Dp), lambda i: (0, 0)),    # per-graph scale/shift
            pl.BlockSpec((Dp, DOp), lambda i: (0, 0)),      # W (bf16)
            pl.BlockSpec((1, DOp), lambda i: (0, 0)),       # bias
        ],
        out_specs=pl.BlockSpec((tile_n, DOp), lambda i: (i, 0)),
        compiler_params=pltpu.CompilerParams(
            dimension_semantics=("parallel",),
            vmem_limit_bytes=vmem_limit),
    )(xp, gidp, scale_shift, wp, bp)

    return outp[:N, :DO]


def _reference(x, batch_num_nodes, gnw, gnb, w, b):
    """Pure-JAX reimplementation of the PyTorch forward (eval mode)."""
    N, D = x.shape
    B = len(batch_num_nodes)
    counts = jnp.asarray(batch_num_nodes, dtype=jnp.float32)
    graph_id = jnp.repeat(jnp.arange(B), jnp.asarray(batch_num_nodes),
                          total_repeat_length=N)
    seg_sum = jax.ops.segment_sum(x, graph_id, num_segments=B)
    mean_g = seg_sum / counts[:, None]
    mean = mean_g[graph_id]
    sub = x - mean
    seg_sq = jax.ops.segment_sum(sub * sub, graph_id, num_segments=B)
    std_g = jnp.sqrt(seg_sq / counts[:, None] + 1e-6)
    std = std_g[graph_id]
    y = gnw * sub / std + gnb
    act = jax.nn.gelu(y, approximate=False)
    return act @ w + b


if __name__ == "__main__":
    # Small shapes consistent with the module: N nodes, d_in -> d_out projection.
    d_in, d_out = 32, 16
    batch_num_nodes = [5, 9, 10]      # 3 graphs, 24 nodes total
    N = sum(batch_num_nodes)

    key = jax.random.PRNGKey(0)
    kx, kw, kb, kgw, kgb = jax.random.split(key, 5)
    x = jax.random.normal(kx, (N, d_in), dtype=jnp.float32)
    gnw = 1.0 + 0.1 * jax.random.normal(kgw, (d_in,), dtype=jnp.float32)
    gnb = 0.1 * jax.random.normal(kgb, (d_in,), dtype=jnp.float32)
    w = jax.random.normal(kw, (d_in, d_out), dtype=jnp.float32) * 0.05
    b = jax.random.normal(kb, (d_out,), dtype=jnp.float32) * 0.05

    ref = _reference(x, batch_num_nodes, gnw, gnb, w, b)

    # single node-tile path
    out = jax.block_until_ready(
        graph_norm_and_proj(x, batch_num_nodes, gnw, gnb, w, b))
    assert out.shape == (N, d_out)
    # bf16 projection -> slightly looser tolerance than pure-fp32
    assert jnp.allclose(out, ref, atol=2e-2, rtol=2e-2), "mismatch (single tile)"

    # multi-tile path: 3 node tiles, graphs spanning tile boundaries
    out_t = jax.block_until_ready(
        graph_norm_and_proj(x, batch_num_nodes, gnw, gnb, w, b, tile_n=8))
    assert jnp.allclose(out_t, ref, atol=2e-2, rtol=2e-2), "mismatch (multi tile)"

    print("KERNEL_OK")
</pallas_src>

<mosaic_0001>
module attributes {stable_mosaic.version = 11 : i64} {
  func.func @stats_kernel(%arg0: i32, %arg1: memref<24x128xf32, #tpu.memory_space<vmem>>, %arg2: memref<24x1xi32, #tpu.memory_space<vmem>>, %arg3: memref<3x1xf32, #tpu.memory_space<vmem>>, %arg4: memref<1x128xf32, #tpu.memory_space<vmem>>, %arg5: memref<1x128xf32, #tpu.memory_space<vmem>>, %arg6: memref<3x256xf32, #tpu.memory_space<vmem>>) attributes {dimension_semantics = [#tpu.dimension_semantics<arbitrary>], iteration_bounds = array<i64: 1>, scalar_prefetch = 0 : i64, scratch_operands = 0 : i64, tpu.core_type = #tpu.core_type<tc>, window_params = [{transform_indices = @transform_0, window_bounds = array<i64: 24, 128>}, {transform_indices = @transform_1, window_bounds = array<i64: 24, 1>}, {pipeline_mode = #tpu.pipeline_mode<synchronous>, transform_indices = @transform_2, window_bounds = array<i64: 3, 1>}, {pipeline_mode = #tpu.pipeline_mode<synchronous>, transform_indices = @transform_3, window_bounds = array<i64: 1, 128>}, {pipeline_mode = #tpu.pipeline_mode<synchronous>, transform_indices = @transform_4, window_bounds = array<i64: 1, 128>}, {pipeline_mode = #tpu.pipeline_mode<synchronous>, transform_indices = @transform_5, window_bounds = array<i64: 3, 256>}]} {
    %c0_i32 = arith.constant 0 : i32
    %0 = arith.cmpi eq, %arg0, %c0_i32 : i32
    %1 = arith.extui %0 : i1 to i32
    %c0_i32_0 = arith.constant 0 : i32
    %2 = arith.cmpi ne, %1, %c0_i32_0 : i32
    scf.if %2 {
      %cst_10 = arith.constant 0.000000e+00 : f32
      %19 = vector.broadcast %cst_10 : f32 to vector<3x256xf32>
      %c0_11 = arith.constant 0 : index
      %c0_12 = arith.constant 0 : index
      %20 = vector.load %arg6[%c0_11, %c0_12] : memref<3x256xf32, #tpu.memory_space<vmem>>, vector<3x256xf32>
      tpu.vector_store %arg6[%c0_11, %c0_12], %19 {strides = array<i32>} : memref<3x256xf32, #tpu.memory_space<vmem>>, vector<3x256xf32>,
    } else {
    }
    %c0 = arith.constant 0 : index
    %c0_1 = arith.constant 0 : index
    %3 = vector.load %arg1[%c0, %c0_1] : memref<24x128xf32, #tpu.memory_space<vmem>>, vector<24x128xf32>
    %c0_2 = arith.constant 0 : index
    %c0_3 = arith.constant 0 : index
    %4 = vector.load %arg2[%c0_2, %c0_3] : memref<24x1xi32, #tpu.memory_space<vmem>>, vector<24x1xi32>
    %5 = tpu.iota {dimensions = array<i32: 1>} : vector<24x3xi32>
    %6 = vector.broadcast %4 : vector<24x1xi32> to vector<24x3xi32>
    %7 = arith.cmpi eq, %6, %5 : vector<24x3xi32>
    %8 = arith.extui %7 : vector<24x3xi1> to vector<24x3xi32>
    %9 = arith.sitofp %8 : vector<24x3xi32> to vector<24x3xf32>
    %10 = arith.mulf %3, %3 : vector<24x128xf32>
    %11 = tpu.concatenate %3, %10 in 1 : vector<24x128xf32>, vector<24x128xf32> -> vector<24x256xf32>
    %c0_4 = arith.constant 0 : index
    %c0_5 = arith.constant 0 : index
    %12 = vector.load %arg6[%c0_4, %c0_5] : memref<3x256xf32, #tpu.memory_space<vmem>>, vector<3x256xf32>
    %cst = arith.constant dense<0.000000e+00> : vector<3x256xf32>
    %13 = tpu.matmul %9, %11, %cst {dimension_numbers = #tpu.dot_dimension_numbers<[0], [0], [1], [1], [0, 1, 1, 1], [], []>} : vector<24x3xf32>, vector<24x256xf32>, vector<3x256xf32> -> vector<3x256xf32>
    %14 = arith.addf %12, %13 : vector<3x256xf32>
    %c0_6 = arith.constant 0 : index
    %c0_7 = arith.constant 0 : index
    %15 = vector.load %arg6[%c0_6, %c0_7] : memref<3x256xf32, #tpu.memory_space<vmem>>, vector<3x256xf32>
    tpu.vector_store %arg6[%c0_6, %c0_7], %14 {strides = array<i32>} : memref<3x256xf32, #tpu.memory_space<vmem>>, vector<3x256xf32>,
    %c0_i32_8 = arith.constant 0 : i32
    %16 = arith.cmpi eq, %arg0, %c0_i32_8 : i32
    %17 = arith.extui %16 : i1 to i32
    %c0_i32_9 = arith.constant 0 : i32
    %18 = arith.cmpi ne, %17, %c0_i32_9 : i32
    scf.if %18 {
      %c0_10 = arith.constant 0 : index
      %c0_11 = arith.constant 0 : index
      %19 = vector.load %arg3[%c0_10, %c0_11] : memref<3x1xf32, #tpu.memory_space<vmem>>, vector<3x1xf32>
      %c0_12 = arith.constant 0 : index
      %c0_13 = arith.constant 0 : index
      %20 = vector.load %arg6[%c0_12, %c0_13] : memref<3x256xf32, #tpu.memory_space<vmem>>, vector<3x128xf32>
      %c0_14 = arith.constant 0 : index
      %c128 = arith.constant 128 : index
      %21 = vector.load %arg6[%c0_14, %c128] : memref<3x256xf32, #tpu.memory_space<vmem>>, vector<3x128xf32>
      %22 = vector.broadcast %19 : vector<3x1xf32> to vector<3x128xf32>
      %23 = arith.mulf %20, %22 : vector<3x128xf32>
      %24 = vector.broadcast %19 : vector<3x1xf32> to vector<3x128xf32>
      %25 = arith.mulf %21, %24 : vector<3x128xf32>
      %26 = arith.mulf %23, %23 : vector<3x128xf32>
      %27 = arith.subf %25, %26 : vector<3x128xf32>
      %c0_15 = arith.constant 0 : index
      %c0_16 = arith.constant 0 : index
      %28 = vector.load %arg4[%c0_15, %c0_16] : memref<1x128xf32, #tpu.memory_space<vmem>>, vector<1x128xf32>
      %cst_17 = arith.constant 9.99999997E-7 : f32
      %29 = vector.broadcast %cst_17 : f32 to vector<3x128xf32>
      %30 = arith.addf %27, %29 : vector<3x128xf32>
      %31 = math.rsqrt %30 : vector<3x128xf32>
      %32 = vector.broadcast %28 : vector<1x128xf32> to vector<3x128xf32>
      %33 = arith.mulf %32, %31 : vector<3x128xf32>
      %c0_18 = arith.constant 0 : index
      %c0_19 = arith.constant 0 : index
      %34 = vector.load %arg5[%c0_18, %c0_19] : memref<1x128xf32, #tpu.memory_space<vmem>>, vector<1x128xf32>
      %35 = arith.mulf %23, %33 : vector<3x128xf32>
      %36 = vector.broadcast %34 : vector<1x128xf32> to vector<3x128xf32>
      %37 = arith.subf %36, %35 : vector<3x128xf32>
      %38 = tpu.concatenate %33, %37 in 1 : vector<3x128xf32>, vector<3x128xf32> -> vector<3x256xf32>
      %c0_20 = arith.constant 0 : index
      %c0_21 = arith.constant 0 : index
      %39 = vector.load %arg6[%c0_20, %c0_21] : memref<3x256xf32, #tpu.memory_space<vmem>>, vector<3x256xf32>
      tpu.vector_store %arg6[%c0_20, %c0_21], %38 {strides = array<i32>} : memref<3x256xf32, #tpu.memory_space<vmem>>, vector<3x256xf32>,
    } else {
    }
    return
  }
  func.func @transform_0(%arg0: i32) -> (i32, i32) {
    %c0_i32 = arith.constant 0 : i32
    %c0_i32_0 = arith.constant 0 : i32
    return %arg0, %c0_i32 : i32, i32
  }
  func.func @transform_1(%arg0: i32) -> (i32, i32) {
    %c0_i32 = arith.constant 0 : i32
    %c0_i32_0 = arith.constant 0 : i32
    return %arg0, %c0_i32 : i32, i32
  }
  func.func @transform_2(%arg0: i32) -> (i32, i32) {
    %c0_i32 = arith.constant 0 : i32
    %c0_i32_0 = arith.constant 0 : i32
    %c0_i32_1 = arith.constant 0 : i32
    return %c0_i32, %c0_i32_0 : i32, i32
  }
  func.func @transform_3(%arg0: i32) -> (i32, i32) {
    %c0_i32 = arith.constant 0 : i32
    %c0_i32_0 = arith.constant 0 : i32
    %c0_i32_1 = arith.constant 0 : i32
    return %c0_i32, %c0_i32_0 : i32, i32
  }
  func.func @transform_4(%arg0: i32) -> (i32, i32) {
    %c0_i32 = arith.constant 0 : i32
    %c0_i32_0 = arith.constant 0 : i32
    %c0_i32_1 = arith.constant 0 : i32
    return %c0_i32, %c0_i32_0 : i32, i32
  }
  func.func @transform_5(%arg0: i32) -> (i32, i32) {
    %c0_i32 = arith.constant 0 : i32
    %c0_i32_0 = arith.constant 0 : i32
    %c0_i32_1 = arith.constant 0 : i32
    return %c0_i32, %c0_i32_0 : i32, i32
  }
}

</mosaic_0001>

<llo_original>
// kernel: tpu_custom_call.1
$region0: #{tpu_custom_call.1}
  #allocation0 [shape = 'u32[]', space=smem, size = 0x4, offset = 0x4, fixed_abs, tag = 'smem constant byte address 0x4 - core index']
  #allocation1 [shape = 'u32[144,128]{1,0:T(1,128)}', space=vmem, size = 0x12000, scoped, tag = 'internal scratch']
  %s0 = inlined_call_operand.vmem [shape: f32[24,128], index: 0, kind: input, shape index: {}]
  %s1 = inlined_call_operand.vmem [shape: s32[24,1], index: 1, kind: input, shape index: {}]
  %s2 = inlined_call_operand.vmem [shape: f32[3,1], index: 2, kind: input, shape index: {}]
  %s3 = inlined_call_operand.vmem [shape: f32[1,128], index: 3, kind: input, shape index: {}]
  %s4 = inlined_call_operand.vmem [shape: f32[1,128], index: 4, kind: input, shape index: {}]
  %s5 = inlined_call_operand.hbm [shape: f32[3,256], index: 5, kind: output, shape index: {}]
  %s6 = sld [smem:[#allocation0]]
  $region38: #{tpu_custom_call.1} parent=0
    _
  %s8 = ssub.s32 1, %s6
  %s9 = scalar_select 0, %s8, %s6
  $region1: #{tpu_custom_call.1} parent=0
    #allocation2 [shape = 'u8[4096]{0}', space=vmem, size = 0x1000, scoped, tag = 'output window, operand 0, single buffered']
    #allocation3 [shape = 's32[1]{0}', space=sflag, size = 0x4, scoped, tag = 'scoped memory for tpu_custom_call.1']
    %10 = vsyncpa [#allocation3], 0
    // Predicated region
    $region2: #{tpu_custom_call.1} parent=1 // pred_check
      _
    $region3: #{tpu_custom_call.1} parent=1 // pred_check_branch
      %12 = sbr.rel (0) target = $region5
    $region4: #{tpu_custom_call.1} parent=1 // pred_region
      _
    $region5: #{tpu_custom_call.1} parent=1 // pred_fallthru
      _
    // Predicated region
    $region6: #{tpu_custom_call.1} parent=1 // pred_check
      _
    $region7: #{tpu_custom_call.1} parent=1 // pred_check_branch
      %14 = sbr.rel (0) target = $region9
    $region8: #{tpu_custom_call.1} parent=1 // pred_region
      _
    $region9: #{tpu_custom_call.1} parent=1 // pred_fallthru
      _
    // Predicated region
    $region10: #{tpu_custom_call.1} parent=1 // pred_check
      _
    $region11: #{tpu_custom_call.1} parent=1 // pred_check_branch
      %16 = sbr.rel (0) target = $region13
    $region12: #{tpu_custom_call.1} parent=1 // pred_region
      _
    $region13: #{tpu_custom_call.1} parent=1 // pred_fallthru
      _
    // Predicated region
    $region14: #{tpu_custom_call.1} parent=1 // pred_check
      _
    $region15: #{tpu_custom_call.1} parent=1 // pred_check_branch
      %18 = sbr.rel (0) target = $region17
    $region16: #{tpu_custom_call.1} parent=1 // pred_region
      _
    $region17: #{tpu_custom_call.1} parent=1 // pred_fallthru
      _
    // Predicated region
    $region18: #{tpu_custom_call.1} parent=1 // pred_check
      _
    $region19: #{tpu_custom_call.1} parent=1 // pred_check_branch
      %20 = sbr.rel (0) target = $region21
    $region20: #{tpu_custom_call.1} parent=1 // pred_region
      _
    $region21: #{tpu_custom_call.1} parent=1 // pred_fallthru
      _
    %p21 = scmp.eq.s32.totalorder 0, 0
    // Predicated region
    $region22: #{tpu_custom_call.1} parent=1 // pred_check
      %p22 = pneg %p21
    $region23: #{tpu_custom_call.1} parent=1 // pred_check_branch
      %24 = sbr.rel (%p22) target = $region25
    $region24: #{tpu_custom_call.1} parent=1 // pred_region
      %25 = vst [vmem:[#allocation2] sm:$0x77] 0.0
    $region25: #{tpu_custom_call.1} parent=1 // pred_fallthru
      _
    %v26 = vld [vmem:[%s0] sm:$0xff]
    %v27 = vld [vmem:[%s0 + $0x8] sm:$0xff]
    %v28 = vld [vmem:[%s0 + $0x10] sm:$0xff]
    %v29 = vld [vmem:[%s1] sm:$0xff]
    %v30 = vld [vmem:[%s1 + $0x8] sm:$0xff]
    %v31 = vld [vmem:[%s1 + $0x10] sm:$0xff]
    %v32 = vlaneseq
    %v33 = vand.u32 %v32, 127
    %34 = vset.pattern.permute.xlu0 0
    %35 = vperm.xlu0 %34, %v29
    %v36 = vpop.permute.xlu0 %35
    %37 = vset.pattern.permute.xlu0 0
    %38 = vperm.xlu0 %37, %v30
    %v39 = vpop.permute.xlu0 %38
    %40 = vset.pattern.permute.xlu0 0
    %41 = vperm.xlu0 %40, %v31
    %v42 = vpop.permute.xlu0 %41
    %vm43 = vcmp.eq.s32.totalorder %v36, %v33
    %vm44 = vcmp.eq.s32.totalorder %v39, %v33
    %vm45 = vcmp.eq.s32.totalorder %v42, %v33
    %v46 = vsel %vm43, 1, 0
    %v47 = vsel %vm44, 1, 0
    %v48 = vsel %vm45, 1, 0
    %v49 = vcvt.s32.f32 %v46
    %v50 = vcvt.s32.f32 %v47
    %v51 = vcvt.s32.f32 %v48
    %v52 = vmul.f32 %v26, %v26
    %v53 = vmul.f32 %v27, %v27
    %v54 = vmul.f32 %v28, %v28
    %v55 = vld [vmem:[#allocation2] sm:$0x77]
    %56 = vxpose.xlu0.b32.start [1/16] %v49, 128
    %57 = vxpose.xlu0.b32.cont [2/16] %v50, 128
    %58 = vxpose.xlu0.b32.cont [3/16] %v51, 128
    %59 = vxpose.xlu0.b32.cont [4/16] 0.0, 128
    %60 = vxpose.xlu0.b32.cont [5/16] 0.0, 128
    %61 = vxpose.xlu0.b32.cont [6/16] 0.0, 128
    %62 = vxpose.xlu0.b32.cont [7/16] 0.0, 128
    %63 = vxpose.xlu0.b32.cont [8/16] 0.0, 128
    %64 = vxpose.xlu0.b32.cont [9/16] 0.0, 128
    %65 = vxpose.xlu0.b32.cont [10/16] 0.0, 128
    %66 = vxpose.xlu0.b32.cont [11/16] 0.0, 128
    %67 = vxpose.xlu0.b32.cont [12/16] 0.0, 128
    %68 = vxpose.xlu0.b32.cont [13/16] 0.0, 128
    %69 = vxpose.xlu0.b32.cont [14/16] 0.0, 128
    %70 = vxpose.xlu0.b32.cont [15/16] 0.0, 128
    %71 = vxpose.xlu0.b32.end [16/16] 0.0, 128
    %v72 = vpop.trf.xlu0
    %v73 = vpop.trf.xlu0
    %v74 = vpop.trf.xlu0
    %v75 = vpop.trf.xlu0
    %v76 = vpop.trf.xlu0
    %v77 = vpop.trf.xlu0
    %v78 = vpop.trf.xlu0
    %v79 = vpop.trf.xlu0
    %v80 = vpop.trf.xlu0
    %v81 = vpop.trf.xlu0
    %v82 = vpop.trf.xlu0
    %v83 = vpop.trf.xlu0
    %v84 = vpop.trf.xlu0
    %v85 = vpop.trf.xlu0
    %v86 = vpop.trf.xlu0
    %v87 = vpop.trf.xlu0
    %vm88 = vcmask 195584
    %v90 = vsel %vm88, %v72, 0
    %92 = vmatprep.subr.mxu0 %v52
    %93 = vmatpush1.msra.mxu0 %v26
    %94 = vmatprep.subr.mxu0 %v53
    %95 = vmatpush1.msra.mxu0 %v27
    %96 = vmatprep.subr.mxu0 %v54
    %97 = vmatpush1.msra.mxu0 %v28
    %98 = vmatprep.subr.mxu0 0.0
    %99 = vmatpush1.msra.mxu0 0.0
    %100 = vmatprep.subr.mxu0 0.0
    %101 = vmatpush1.msra.mxu0 0.0
    %102 = vmatprep.subr.mxu0 0.0
    %103 = vmatpush1.msra.mxu0 0.0
    %104 = vmatprep.subr.mxu0 0.0
    %105 = vmatpush1.msra.mxu0 0.0
    %106 = vmatprep.subr.mxu0 0.0
    %107 = vmatpush1.msra.mxu0 0.0
    %108 = vmatprep.subr.mxu0 0.0
    %109 = vmatpush1.msra.mxu0 0.0
    %110 = vmatprep.subr.mxu0 0.0
    %111 = vmatpush1.msra.mxu0 0.0
    %112 = vmatprep.subr.mxu0 0.0
    %113 = vmatpush1.msra.mxu0 0.0
    %114 = vmatprep.subr.mxu0 0.0
    %115 = vmatpush1.msra.mxu0 0.0
    %116 = vmatprep.subr.mxu0 0.0
    %117 = vmatpush1.msra.mxu0 0.0
    %118 = vmatprep.subr.mxu0 0.0
    %119 = vmatpush1.msra.mxu0 0.0
    %120 = vmatprep.subr.mxu0 0.0
    %121 = vmatpush1.msra.mxu0 0.0
    %122 = vmatprep.subr.mxu0 0.0
    %123 = vmatpush1.msra.mxu0 0.0
    %124 = vmatprep.subr.mxu0 0.0
    %125 = vmatpush1.msra.mxu0 0.0
    %126 = vmatprep.subr.mxu0 0.0
    %127 = vmatpush1.msra.mxu0 0.0
    %128 = vmatprep.subr.mxu0 0.0
    %129 = vmatpush1.msra.mxu0 0.0
    %130 = vmatprep.subr.mxu0 0.0
    %131 = vmatpush1.msra.mxu0 0.0
    %132 = vmatprep.subr.mxu0 0.0
    %133 = vmatpush1.msra.mxu0 0.0
    %134 = vmatprep.subr.mxu0 0.0
    %135 = vmatpush1.msra.mxu0 0.0
    %136 = vmatprep.subr.mxu0 0.0
    %137 = vmatpush1.msra.mxu0 0.0
    %138 = vmatprep.subr.mxu0 0.0
    %139 = vmatpush1.msra.mxu0 0.0
    %140 = vmatprep.subr.mxu0 0.0
    %141 = vmatpush1.msra.mxu0 0.0
    %142 = vmatprep.subr.mxu0 0.0
    %143 = vmatpush1.msra.mxu0 0.0
    %144 = vmatprep.subr.mxu0 0.0
    %145 = vmatpush1.msra.mxu0 0.0
    %146 = vmatprep.subr.mxu0 0.0
    %147 = vmatpush1.msra.mxu0 0.0
    %148 = vmatprep.subr.mxu0 0.0
    %149 = vmatpush1.msra.mxu0 0.0
    %150 = vmatprep.subr.mxu0 0.0
    %151 = vmatpush1.msra.mxu0 0.0
    %152 = vmatprep.subr.mxu0 0.0
    %153 = vmatpush1.msra.mxu0 0.0
    %154 = vmatprep.subr.mxu0 0.0
    %155 = vmatpush1.msra.mxu0 0.0
    %156 = vmatprep.mubr.f32.mxu0 0.0
    %157 = vmatmul.mubr.f32.gmra.mrb[0].mxu0 %v90
    %v158 = vpop.f32.mrb[0].mxu0
    %v159 = vadd.f32 0.0, %v158
    %v160 = vpop.f32.mrb[0].mxu0
    %v161 = vadd.f32 0.0, %v160
    %162 = vdwg.mxu0
    %v165 = vcombine.low %v159, %v161
    %v167 = vadd.f32 %v55, %v165
    %168 = vst [vmem:[#allocation2] sm:$0x77] %v167
    // Predicated region
    $region26: #{tpu_custom_call.1} parent=1 // pred_check
      %p169 = pneg %p21
    $region27: #{tpu_custom_call.1} parent=1 // pred_check_branch
      %171 = sbr.rel (%p169) target = $region29
    $region28: #{tpu_custom_call.1} parent=1 // pred_region
      %v172 = vld [vmem:[%s2] sm:$0x7]
      %v173 = vld [vmem:[#allocation2] sm:$0x7]
      %v174 = vld [vmem:[#allocation2 + $0x4] sm:$0x7]
      %176 = vset.pattern.permute.xlu0 0
      %177 = vperm.xlu0 %176, %v172
      %v178 = vpop.permute.xlu0 %177
      %v180 = vmul.f32 %v173, %v178
      %v181 = vmul.f32 %v174, %v178
      %v182 = vmul.f32 %v180, %v180
      %v183 = vsub.f32 %v181, %v182
      %v184 = vld [vmem:[%s3] sm:$0x1]
      %v185 = vadd.f32 %v183, 1e-06
      %v186 = vrsqrt.pop %v185
      %v188 = vlaneseq
      %v189 = vshrl.u32 %v188, 7
      %v190 = vsub.s32 0, %v189
      %v191 = vrot.slane %v184, %v190
      %v193 = vmul.f32 %v191, %v186
      %v194 = vld [vmem:[%s4] sm:$0x1]
      %v195 = vmul.f32 %v180, %v193
      %v197 = vlaneseq
      %v198 = vshrl.u32 %v197, 7
      %v199 = vsub.s32 0, %v198
      %v200 = vrot.slane %v194, %v199
      %v202 = vsub.f32 %v200, %v195
      %v205 = vcombine.low %v193, %v202
      %207 = vst [vmem:[#allocation2] sm:$0x77] %v205
    $region29: #{tpu_custom_call.1} parent=1 // pred_fallthru
      _
    // Predicated region
    $region30: #{tpu_custom_call.1} parent=1 // pred_check
      _
    $region31: #{tpu_custom_call.1} parent=1 // pred_check_branch
      %209 = sbr.rel (0) target = $region33
    $region32: #{tpu_custom_call.1} parent=1 // pred_region
      %s211 = ssub.s32 128, 128
      %212 = vsyncadd [#allocation3], %s211
      %s214 = sshll.u32 [#allocation2], 4
      %s215 = int_to_ptr.vmem [resolvable:$true] %s214
      %217 = dma.vmem_to_hbm [thread:$0]  %s215, 128, %s5, [#allocation3]
    $region33: #{tpu_custom_call.1} parent=1 // pred_fallthru
      _
    // Predicated region
    $region34: #{tpu_custom_call.1} parent=1 // pred_check
      _
    $region35: #{tpu_custom_call.1} parent=1 // pred_check_branch
      %219 = sbr.rel (0) target = $region37
    $region36: #{tpu_custom_call.1} parent=1 // pred_region
      %220 = dma.done [#allocation3], 128
    $region37: #{tpu_custom_call.1} parent=1 // pred_fallthru
      _
    %221 = vsyncpa [#allocation3], 1

</llo_original>
